<compile_context>
chip_gen: v5e
topology: v5e:2x2
jax: 0.10.0
libtpu: 0.0.40
codegen_flags: <defaults>
</compile_context>

<pallas_src>
import functools

import jax
import jax.numpy as jnp
from jax.experimental import pallas as pl
from jax.experimental.pallas import tpu as pltpu


# ---------------------------------------------------------------------------
# Fused single-pass kernel: one (Nb, C, HW) slab per grid step.
# ---------------------------------------------------------------------------
def _ca_fused_kernel(x_ref, w1t_ref, b1_ref, w2t_ref, b2_ref, o_ref):
    # x_ref: (Nb, C, HW)   w1t: (C, Cr) (already scaled by 1/HW)
    # b1: (1, Cr)          w2t: (Cr, C)   b2: (1, C)
    x = x_ref[...]                                        # (Nb, C, HW) f32

    # Global average pool: sum over the lane (spatial) axis; the 1/HW factor
    # is folded into w1t on the wrapper side.
    pooled = jnp.sum(x, axis=2)                           # (Nb, C)

    # Squeeze (1x1 conv #1) + ReLU, batched over Nb samples.
    h = jnp.dot(pooled, w1t_ref[...],
                preferred_element_type=jnp.float32) + b1_ref[...]     # (Nb, Cr)
    h = jnp.maximum(h, 0.0)

    # Excite (1x1 conv #2) + sigmoid.
    s = jnp.dot(h, w2t_ref[...],
                preferred_element_type=jnp.float32) + b2_ref[...]     # (Nb, C)
    s = jax.nn.sigmoid(s)

    # Channel-wise rescale (broadcast (Nb, C, 1) over HW lanes).
    o_ref[...] = x * s[:, :, None]


# ---------------------------------------------------------------------------
# Two-pass fallback, pass 1: pool over HW tiles + squeeze/excite -> scale s.
# ---------------------------------------------------------------------------
def _ca_pool_scale_kernel(x_ref, w1t_ref, b1_ref, w2t_ref, b2_ref,
                          s_ref, acc_ref, *, hw_total, thw):
    k = pl.program_id(1)

    @pl.when(k == 0)
    def _():
        acc_ref[...] = jnp.zeros_like(acc_ref)

    x = x_ref[...]                                        # (1, C, thw)
    if hw_total % thw != 0:
        # Mask the ragged spatial tail so garbage padding never enters the sum.
        lane = jax.lax.broadcasted_iota(jnp.int32, x.shape, 2) + k * thw
        x = jnp.where(lane < hw_total, x, 0.0)
    acc_ref[...] += jnp.sum(x, axis=2)                    # (1, C)

    @pl.when(k == pl.num_programs(1) - 1)
    def _():
        pooled = acc_ref[...]                             # (1, C); 1/HW in w1t
        h = jnp.dot(pooled, w1t_ref[...],
                    preferred_element_type=jnp.float32) + b1_ref[...]
        h = jnp.maximum(h, 0.0)
        s = jnp.dot(h, w2t_ref[...],
                    preferred_element_type=jnp.float32) + b2_ref[...]
        s_ref[...] = jax.nn.sigmoid(s)[:, :, None]        # (1, C, 1)


# ---------------------------------------------------------------------------
# Two-pass fallback, pass 2: stream x through HW tiles and rescale.
# ---------------------------------------------------------------------------
def _ca_scale_kernel(s_ref, x_ref, o_ref):
    # s: (1, C, 1)   x: (1, C, thw)
    o_ref[...] = x_ref[...] * s_ref[...]


def _single_pass_vmem_cap():
    """Conservative VMEM budget for the fused path (double-buffered x + out)."""
    try:
        info = pltpu.get_tpu_info()
        cap = int(getattr(info, "vmem_capacity_bytes", 64 << 20))
    except Exception:  # pragma: no cover - be robust to API drift
        cap = 64 << 20
    # Leave generous headroom for Mosaic internals; ~40 MiB on v7x (64 MiB
    # physical VMEM), up to ~80 MiB on v5e/v6e (128 MiB).
    return int(min(80 << 20, max(24 << 20, cap - (24 << 20))))


def _ca_two_pass(x_flat, w1t, b1_row, w2t, b2_row):
    N, C, HW = x_flat.shape
    Cr = w1t.shape[1]

    # ~2-4 MiB spatial tiles, multiple of 128 lanes (ragged tail is masked).
    tile_target = 4 << 20
    if HW >= 128:
        thw = min(HW, max(128, ((tile_target // (C * 4)) // 128) * 128))
    else:
        thw = HW
    n_hw = pl.cdiv(HW, thw)
    weight_bytes = (C * Cr + Cr + Cr * C + C) * 4

    # Pass 1: per-sample pooled sums -> sigmoid scale (N, C, 1).
    vmem1 = int(max(16 << 20, 2 * C * thw * 4 + 2 * weight_bytes + (2 << 20)))
    s = pl.pallas_call(
        functools.partial(_ca_pool_scale_kernel, hw_total=HW, thw=thw),
        out_shape=jax.ShapeDtypeStruct((N, C, 1), jnp.float32),
        grid=(N, n_hw),
        in_specs=[
            pl.BlockSpec((1, C, thw), lambda n, k: (n, 0, k)),
            pl.BlockSpec((C, Cr), lambda n, k: (0, 0)),
            pl.BlockSpec((1, Cr), lambda n, k: (0, 0)),
            pl.BlockSpec((Cr, C), lambda n, k: (0, 0)),
            pl.BlockSpec((1, C), lambda n, k: (0, 0)),
        ],
        out_specs=pl.BlockSpec((1, C, 1), lambda n, k: (n, 0, 0)),
        scratch_shapes=[pltpu.VMEM((1, C), jnp.float32)],
        compiler_params=pltpu.CompilerParams(
            dimension_semantics=("parallel", "arbitrary"),
            vmem_limit_bytes=vmem1,
        ),
    )(x_flat, w1t, b1_row, w2t, b2_row)

    # Pass 2: stream x and rescale, tiled freely over HW.
    vmem2 = int(max(16 << 20, 4 * C * thw * 4 + (2 << 20)))
    out_flat = pl.pallas_call(
        _ca_scale_kernel,
        out_shape=jax.ShapeDtypeStruct((N, C, HW), jnp.float32),
        grid=(N, n_hw),
        in_specs=[
            pl.BlockSpec((1, C, 1), lambda n, k: (n, 0, 0)),
            pl.BlockSpec((1, C, thw), lambda n, k: (n, 0, k)),
        ],
        out_specs=pl.BlockSpec((1, C, thw), lambda n, k: (n, 0, k)),
        compiler_params=pltpu.CompilerParams(
            dimension_semantics=("parallel", "parallel"),
            vmem_limit_bytes=vmem2,
        ),
    )(s, x_flat)
    return out_flat


@functools.partial(jax.jit, static_argnames=("force_two_pass",))
def ca_layer(x_nchw, w1, b1, w2, b2, *, force_two_pass=False):
    """x_nchw: (N, C, H, W) float32. Returns the same shape."""
    N, C, H, W = x_nchw.shape
    HW = H * W
    Cr = w1.shape[0]

    x_flat = x_nchw.reshape(N, C, HW).astype(jnp.float32)

    # Pre-transpose weights for row-major (Nb, C) @ (C, Cr) matmuls and fold
    # the 1/HW pooling scale into the first weight.
    w1t = jnp.transpose(w1) * (1.0 / HW)                  # (C, Cr)
    w2t = jnp.transpose(w2)                               # (Cr, C)
    b1_row = b1.reshape(1, Cr)
    b2_row = b2.reshape(1, C)

    # Bytes-driven batch block: ~4 MiB per step (HBM roofline plateau), no
    # divisor constraints, ragged last block via cdiv.
    per_sample_bytes = C * HW * 4
    target_block_bytes = 4 << 20
    Nb = max(1, min(N, target_block_bytes // max(per_sample_bytes, 1)))
    block_bytes = Nb * per_sample_bytes
    weight_bytes = (C * Cr + Cr + Cr * C + C) * 4
    needed = 4 * block_bytes + 2 * weight_bytes + (2 << 20)

    if force_two_pass or needed > _single_pass_vmem_cap():
        # Per-sample slab too big to double-buffer safely (esp. v7x 64 MiB
        # VMEM): pooling pass + streaming scale pass tiled over HW.
        out_flat = _ca_two_pass(x_flat, w1t, b1_row, w2t, b2_row)
    else:
        grid = (pl.cdiv(N, Nb),)
        vmem_limit = int(max(16 << 20, needed))
        out_flat = pl.pallas_call(
            _ca_fused_kernel,
            out_shape=jax.ShapeDtypeStruct((N, C, HW), jnp.float32),
            grid=grid,
            in_specs=[
                pl.BlockSpec((Nb, C, HW), lambda n: (n, 0, 0)),
                pl.BlockSpec((C, Cr), lambda n: (0, 0)),
                pl.BlockSpec((1, Cr), lambda n: (0, 0)),
                pl.BlockSpec((Cr, C), lambda n: (0, 0)),
                pl.BlockSpec((1, C), lambda n: (0, 0)),
            ],
            out_specs=pl.BlockSpec((Nb, C, HW), lambda n: (n, 0, 0)),
            compiler_params=pltpu.CompilerParams(
                dimension_semantics=("parallel",),
                vmem_limit_bytes=vmem_limit,
            ),
        )(x_flat, w1t, b1_row, w2t, b2_row)

    return out_flat.reshape(N, C, H, W)


def ca_layer_ref(x, w1, b1, w2, b2):
    """Pure-JAX reference matching the PyTorch module."""
    y = jnp.mean(x, axis=(2, 3), keepdims=True)                      # (N,C,1,1)
    y = jnp.einsum('rc,ncij->nrij', w1, y) + b1[None, :, None, None]
    y = jnp.maximum(y, 0.0)
    y = jnp.einsum('cr,nrij->ncij', w2, y) + b2[None, :, None, None]
    y = jax.nn.sigmoid(y)
    return x * y


if __name__ == "__main__":
    # Module config: channel=64, reduction=16 -> hidden = 4
    N, C, H, W = 2, 64, 16, 16
    reduction = 16
    Cr = C // reduction

    key = jax.random.PRNGKey(0)
    kx, kw1, kb1, kw2, kb2 = jax.random.split(key, 5)

    x = jax.random.normal(kx, (N, C, H, W), dtype=jnp.float32)
    # Deterministic synthetic parameters (shapes from nn.Conv2d(C, C//r, 1) etc.)
    w1 = jax.random.normal(kw1, (Cr, C), dtype=jnp.float32) * 0.1    # squeeze
    b1 = jax.random.normal(kb1, (Cr,), dtype=jnp.float32) * 0.1
    w2 = jax.random.normal(kw2, (C, Cr), dtype=jnp.float32) * 0.1    # excite
    b2 = jax.random.normal(kb2, (C,), dtype=jnp.float32) * 0.1

    ref = jax.block_until_ready(ca_layer_ref(x, w1, b1, w2, b2))

    # Default fused single-pass path.
    out = jax.block_until_ready(ca_layer(x, w1, b1, w2, b2))
    assert out.shape == (N, C, H, W)
    assert jnp.allclose(out, ref, atol=1e-5, rtol=1e-5), "fused path mismatch"

    # Two-pass (pool + stream-scale) fallback path, exercised explicitly so the
    # v7x / large-feature-map branch is compile- and correctness-checked too.
    out2 = jax.block_until_ready(ca_layer(x, w1, b1, w2, b2, force_two_pass=True))
    assert jnp.allclose(out2, ref, atol=1e-5, rtol=1e-5), "two-pass path mismatch"

    print("KERNEL_OK")
</pallas_src>

<mosaic_0001>
module attributes {stable_mosaic.version = 11 : i64} {
  func.func @_ca_fused_kernel(%arg0: i32, %arg1: memref<2x64x256xf32, #tpu.memory_space<vmem>>, %arg2: memref<64x4xf32, #tpu.memory_space<vmem>>, %arg3: memref<1x4xf32, #tpu.memory_space<vmem>>, %arg4: memref<4x64xf32, #tpu.memory_space<vmem>>, %arg5: memref<1x64xf32, #tpu.memory_space<vmem>>, %arg6: memref<2x64x256xf32, #tpu.memory_space<vmem>>) attributes {dimension_semantics = [#tpu.dimension_semantics<parallel>], iteration_bounds = array<i64: 1>, scalar_prefetch = 0 : i64, scratch_operands = 0 : i64, tpu.core_type = #tpu.core_type<tc>, window_params = [{transform_indices = @transform_0, window_bounds = array<i64: 2, 64, 256>}, {pipeline_mode = #tpu.pipeline_mode<synchronous>, transform_indices = @transform_1, window_bounds = array<i64: 64, 4>}, {pipeline_mode = #tpu.pipeline_mode<synchronous>, transform_indices = @transform_2, window_bounds = array<i64: 1, 4>}, {pipeline_mode = #tpu.pipeline_mode<synchronous>, transform_indices = @transform_3, window_bounds = array<i64: 4, 64>}, {pipeline_mode = #tpu.pipeline_mode<synchronous>, transform_indices = @transform_4, window_bounds = array<i64: 1, 64>}, {transform_indices = @transform_5, window_bounds = array<i64: 2, 64, 256>}]} {
    %c0 = arith.constant 0 : index
    %c0_0 = arith.constant 0 : index
    %c0_1 = arith.constant 0 : index
    %0 = vector.load %arg1[%c0, %c0_0, %c0_1] : memref<2x64x256xf32, #tpu.memory_space<vmem>>, vector<2x64x256xf32>
    %cst = arith.constant dense<0.000000e+00> : vector<2x64xf32>
    %1 = vector.multi_reduction <add>, %0, %cst [2] : vector<2x64x256xf32> to vector<2x64xf32>
    %c0_2 = arith.constant 0 : index
    %c0_3 = arith.constant 0 : index
    %2 = vector.load %arg2[%c0_2, %c0_3] : memref<64x4xf32, #tpu.memory_space<vmem>>, vector<64x4xf32>
    %cst_4 = arith.constant dense<0.000000e+00> : vector<2x4xf32>
    %3 = tpu.matmul %1, %2, %cst_4 {dimension_numbers = #tpu.dot_dimension_numbers<[1], [0], [0], [1], [0, 0, 1, 1], [], []>} : vector<2x64xf32>, vector<64x4xf32>, vector<2x4xf32> -> vector<2x4xf32>
    %c0_5 = arith.constant 0 : index
    %c0_6 = arith.constant 0 : index
    %4 = vector.load %arg3[%c0_5, %c0_6] : memref<1x4xf32, #tpu.memory_space<vmem>>, vector<1x4xf32>
    %5 = vector.broadcast %4 : vector<1x4xf32> to vector<2x4xf32>
    %6 = arith.addf %3, %5 : vector<2x4xf32>
    %cst_7 = arith.constant 0.000000e+00 : f32
    %7 = vector.broadcast %cst_7 : f32 to vector<2x4xf32>
    %8 = arith.maximumf %6, %7 : vector<2x4xf32>
    %c0_8 = arith.constant 0 : index
    %c0_9 = arith.constant 0 : index
    %9 = vector.load %arg4[%c0_8, %c0_9] : memref<4x64xf32, #tpu.memory_space<vmem>>, vector<4x64xf32>
    %cst_10 = arith.constant dense<0.000000e+00> : vector<2x64xf32>
    %10 = tpu.matmul %8, %9, %cst_10 {dimension_numbers = #tpu.dot_dimension_numbers<[1], [0], [0], [1], [0, 0, 1, 1], [], []>} : vector<2x4xf32>, vector<4x64xf32>, vector<2x64xf32> -> vector<2x64xf32>
    %c0_11 = arith.constant 0 : index
    %c0_12 = arith.constant 0 : index
    %11 = vector.load %arg5[%c0_11, %c0_12] : memref<1x64xf32, #tpu.memory_space<vmem>>, vector<1x64xf32>
    %12 = vector.broadcast %11 : vector<1x64xf32> to vector<2x64xf32>
    %13 = arith.addf %10, %12 : vector<2x64xf32>
    %14 = arith.negf %13 : vector<2x64xf32>
    %15 = math.exp %14 : vector<2x64xf32>
    %cst_13 = arith.constant 1.000000e+00 : f32
    %16 = vector.broadcast %cst_13 : f32 to vector<2x64xf32>
    %17 = arith.addf %16, %15 : vector<2x64xf32>
    %18 = arith.divf %16, %17 : vector<2x64xf32>
    %19 = vector.shape_cast %18 : vector<2x64xf32> to vector<2x64x1xf32>
    %20 = vector.broadcast %19 : vector<2x64x1xf32> to vector<2x64x256xf32>
    %21 = arith.mulf %0, %20 : vector<2x64x256xf32>
    %c0_14 = arith.constant 0 : index
    %c0_15 = arith.constant 0 : index
    %c0_16 = arith.constant 0 : index
    %22 = vector.load %arg6[%c0_14, %c0_15, %c0_16] : memref<2x64x256xf32, #tpu.memory_space<vmem>>, vector<2x64x256xf32>
    tpu.vector_store %arg6[%c0_14, %c0_15, %c0_16], %21 {strides = array<i32>} : memref<2x64x256xf32, #tpu.memory_space<vmem>>, vector<2x64x256xf32>,
    return
  }
  func.func @transform_0(%arg0: i32) -> (i32, i32, i32) {
    %c0_i32 = arith.constant 0 : i32
    %c0_i32_0 = arith.constant 0 : i32
    %c0_i32_1 = arith.constant 0 : i32
    return %arg0, %c0_i32, %c0_i32_0 : i32, i32, i32
  }
  func.func @transform_1(%arg0: i32) -> (i32, i32) {
    %c0_i32 = arith.constant 0 : i32
    %c0_i32_0 = arith.constant 0 : i32
    %c0_i32_1 = arith.constant 0 : i32
    return %c0_i32, %c0_i32_0 : i32, i32
  }
  func.func @transform_2(%arg0: i32) -> (i32, i32) {
    %c0_i32 = arith.constant 0 : i32
    %c0_i32_0 = arith.constant 0 : i32
    %c0_i32_1 = arith.constant 0 : i32
    return %c0_i32, %c0_i32_0 : i32, i32
  }
  func.func @transform_3(%arg0: i32) -> (i32, i32) {
    %c0_i32 = arith.constant 0 : i32
    %c0_i32_0 = arith.constant 0 : i32
    %c0_i32_1 = arith.constant 0 : i32
    return %c0_i32, %c0_i32_0 : i32, i32
  }
  func.func @transform_4(%arg0: i32) -> (i32, i32) {
    %c0_i32 = arith.constant 0 : i32
    %c0_i32_0 = arith.constant 0 : i32
    %c0_i32_1 = arith.constant 0 : i32
    return %c0_i32, %c0_i32_0 : i32, i32
  }
  func.func @transform_5(%arg0: i32) -> (i32, i32, i32) {
    %c0_i32 = arith.constant 0 : i32
    %c0_i32_0 = arith.constant 0 : i32
    %c0_i32_1 = arith.constant 0 : i32
    return %arg0, %c0_i32, %c0_i32_0 : i32, i32, i32
  }
}

</mosaic_0001>

<llo_original>
// kernel: ca_layer.1
$region0: #{ca_layer.1}
  #allocation0 [shape = 'u32[]', space=smem, size = 0x4, offset = 0x4, fixed_abs, tag = 'smem constant byte address 0x4 - core index']
  #allocation1 [shape = 'u32[72,128]{1,0:T(1,128)}', space=vmem, size = 0x9000, scoped, tag = 'internal scratch']
  %s0 = inlined_call_operand.vmem [shape: f32[2,64,256], index: 0, kind: input, shape index: {}]
  %s1 = inlined_call_operand.vmem [shape: f32[64,4], index: 1, kind: input, shape index: {}]
  %s2 = inlined_call_operand.vmem [shape: f32[1,4], index: 2, kind: input, shape index: {}]
  %s3 = inlined_call_operand.vmem [shape: f32[4,64], index: 3, kind: input, shape index: {}]
  %s4 = inlined_call_operand.vmem [shape: f32[1,64], index: 4, kind: input, shape index: {}]
  %s5 = inlined_call_operand.vmem [shape: f32[2,64,256], index: 5, kind: output, shape index: {}]
  %s6 = sld [smem:[#allocation0]]
  $region30: #{ca_layer.1} parent=0
    _
  %s8 = ssub.s32 1, %s6
  %s9 = scalar_select 0, %s8, %s6
  // Predicated region
  $region2: #{ca_layer.1} parent=0 // pred_check
    _
  $region3: #{ca_layer.1} parent=0 // pred_check_branch
    %11 = sbr.rel (0) target = $region5
  $region4: #{ca_layer.1} parent=0 // pred_region
    _
  $region5: #{ca_layer.1} parent=0 // pred_fallthru
    _
  // Predicated region
  $region6: #{ca_layer.1} parent=0 // pred_check
    _
  $region7: #{ca_layer.1} parent=0 // pred_check_branch
    %13 = sbr.rel (0) target = $region9
  $region8: #{ca_layer.1} parent=0 // pred_region
    _
  $region9: #{ca_layer.1} parent=0 // pred_fallthru
    _
  // Predicated region
  $region10: #{ca_layer.1} parent=0 // pred_check
    _
  $region11: #{ca_layer.1} parent=0 // pred_check_branch
    %15 = sbr.rel (0) target = $region13
  $region12: #{ca_layer.1} parent=0 // pred_region
    _
  $region13: #{ca_layer.1} parent=0 // pred_fallthru
    _
  // Predicated region
  $region14: #{ca_layer.1} parent=0 // pred_check
    _
  $region15: #{ca_layer.1} parent=0 // pred_check_branch
    %17 = sbr.rel (0) target = $region17
  $region16: #{ca_layer.1} parent=0 // pred_region
    _
  $region17: #{ca_layer.1} parent=0 // pred_fallthru
    _
  // Predicated region
  $region18: #{ca_layer.1} parent=0 // pred_check
    _
  $region19: #{ca_layer.1} parent=0 // pred_check_branch
    %19 = sbr.rel (0) target = $region21
  $region20: #{ca_layer.1} parent=0 // pred_region
    _
  $region21: #{ca_layer.1} parent=0 // pred_fallthru
    _
  %v20 = vld [vmem:[%s0] sm:$0xff]
  %v21 = vld [vmem:[%s0 + $0x8] sm:$0xff]
  %v22 = vld [vmem:[%s0 + $0x10] sm:$0xff]
  %v23 = vld [vmem:[%s0 + $0x18] sm:$0xff]
  %v24 = vld [vmem:[%s0 + $0x20] sm:$0xff]
  %v25 = vld [vmem:[%s0 + $0x28] sm:$0xff]
  %v26 = vld [vmem:[%s0 + $0x30] sm:$0xff]
  %v27 = vld [vmem:[%s0 + $0x38] sm:$0xff]
  %v28 = vld [vmem:[%s0 + $0x40] sm:$0xff]
  %v29 = vld [vmem:[%s0 + $0x48] sm:$0xff]
  %v30 = vld [vmem:[%s0 + $0x50] sm:$0xff]
  %v31 = vld [vmem:[%s0 + $0x58] sm:$0xff]
  %v32 = vld [vmem:[%s0 + $0x60] sm:$0xff]
  %v33 = vld [vmem:[%s0 + $0x68] sm:$0xff]
  %v34 = vld [vmem:[%s0 + $0x70] sm:$0xff]
  %v35 = vld [vmem:[%s0 + $0x78] sm:$0xff]
  %v36 = vld [vmem:[%s0 + $0x80] sm:$0xff]
  %v37 = vld [vmem:[%s0 + $0x88] sm:$0xff]
  %v38 = vld [vmem:[%s0 + $0x90] sm:$0xff]
  %v39 = vld [vmem:[%s0 + $0x98] sm:$0xff]
  %v40 = vld [vmem:[%s0 + $0xa0] sm:$0xff]
  %v41 = vld [vmem:[%s0 + $0xa8] sm:$0xff]
  %v42 = vld [vmem:[%s0 + $0xb0] sm:$0xff]
  %v43 = vld [vmem:[%s0 + $0xb8] sm:$0xff]
  %v44 = vld [vmem:[%s0 + $0xc0] sm:$0xff]
  %v45 = vld [vmem:[%s0 + $0xc8] sm:$0xff]
  %v46 = vld [vmem:[%s0 + $0xd0] sm:$0xff]
  %v47 = vld [vmem:[%s0 + $0xd8] sm:$0xff]
  %v48 = vld [vmem:[%s0 + $0xe0] sm:$0xff]
  %v49 = vld [vmem:[%s0 + $0xe8] sm:$0xff]
  %v50 = vld [vmem:[%s0 + $0xf0] sm:$0xff]
  %v51 = vld [vmem:[%s0 + $0xf8] sm:$0xff]
  %v52 = vadd.f32 %v20, %v21
  %53 = vadd.xlane.f32.xlu0 %v52
  %v54 = vpop.xlane.xlu0 %53
  %v55 = vadd.f32 %v22, %v23
  %56 = vadd.xlane.f32.xlu0 %v55
  %v57 = vpop.xlane.xlu0 %56
  %v58 = vadd.f32 %v24, %v25
  %59 = vadd.xlane.f32.xlu0 %v58
  %v60 = vpop.xlane.xlu0 %59
  %v61 = vadd.f32 %v26, %v27
  %62 = vadd.xlane.f32.xlu0 %v61
  %v63 = vpop.xlane.xlu0 %62
  %v64 = vadd.f32 %v28, %v29
  %65 = vadd.xlane.f32.xlu0 %v64
  %v66 = vpop.xlane.xlu0 %65
  %v67 = vadd.f32 %v30, %v31
  %68 = vadd.xlane.f32.xlu0 %v67
  %v69 = vpop.xlane.xlu0 %68
  %v70 = vadd.f32 %v32, %v33
  %71 = vadd.xlane.f32.xlu0 %v70
  %v72 = vpop.xlane.xlu0 %71
  %v73 = vadd.f32 %v34, %v35
  %74 = vadd.xlane.f32.xlu0 %v73
  %v75 = vpop.xlane.xlu0 %74
  %v76 = vadd.f32 %v36, %v37
  %77 = vadd.xlane.f32.xlu0 %v76
  %v78 = vpop.xlane.xlu0 %77
  %v79 = vadd.f32 %v38, %v39
  %80 = vadd.xlane.f32.xlu0 %v79
  %v81 = vpop.xlane.xlu0 %80
  %v82 = vadd.f32 %v40, %v41
  %83 = vadd.xlane.f32.xlu0 %v82
  %v84 = vpop.xlane.xlu0 %83
  %v85 = vadd.f32 %v42, %v43
  %86 = vadd.xlane.f32.xlu0 %v85
  %v87 = vpop.xlane.xlu0 %86
  %v88 = vadd.f32 %v44, %v45
  %89 = vadd.xlane.f32.xlu0 %v88
  %v90 = vpop.xlane.xlu0 %89
  %v91 = vadd.f32 %v46, %v47
  %92 = vadd.xlane.f32.xlu0 %v91
  %v93 = vpop.xlane.xlu0 %92
  %v94 = vadd.f32 %v48, %v49
  %95 = vadd.xlane.f32.xlu0 %v94
  %v96 = vpop.xlane.xlu0 %95
  %v97 = vadd.f32 %v50, %v51
  %98 = vadd.xlane.f32.xlu0 %v97
  %v99 = vpop.xlane.xlu0 %98
  %v100 = vld [vmem:[%s1] sm:$0xff]
  %v101 = vld [vmem:[%s1 + $0x8] sm:$0xff]
  %v102 = vld [vmem:[%s1 + $0x10] sm:$0xff]
  %v103 = vld [vmem:[%s1 + $0x18] sm:$0xff]
  %v104 = vld [vmem:[%s1 + $0x20] sm:$0xff]
  %v105 = vld [vmem:[%s1 + $0x28] sm:$0xff]
  %v106 = vld [vmem:[%s1 + $0x30] sm:$0xff]
  %v107 = vld [vmem:[%s1 + $0x38] sm:$0xff]
  %v108 = vld [vmem:[%s2] sm:$0x1]
  %v110 = vperm.slane %v108, 0
  %v128 = vlaneseq
  %v129 = vand.u32 %v128, 127
  %v130 = vperm.slane %v54, %v129
  %v131 = vadd.s32 %v129, 4294967288
  %v132 = vperm.slane %v57, %v131
  %vm133 = vcmask 130112
  %v134 = vsel %vm133, %v132, %v130
  %v135 = vadd.s32 %v129, 4294967280
  %v136 = vperm.slane %v60, %v135
  %vm137 = vcmask 195712
  %v138 = vsel %vm137, %v136, %v134
  %v139 = vadd.s32 %v129, 4294967272
  %v140 = vperm.slane %v63, %v139
  %vm141 = vcmask 261312
  %v142 = vsel %vm141, %v140, %v138
  %v143 = vadd.s32 %v129, 4294967264
  %v144 = vperm.slane %v66, %v143
  %vm145 = vcmask 326912
  %v146 = vsel %vm145, %v144, %v142
  %v147 = vadd.s32 %v129, 4294967256
  %v148 = vperm.slane %v69, %v147
  %vm149 = vcmask 392512
  %v150 = vsel %vm149, %v148, %v146
  %v151 = vadd.s32 %v129, 4294967248
  %v152 = vperm.slane %v72, %v151
  %vm153 = vcmask 458112
  %v154 = vsel %vm153, %v152, %v150
  %v155 = vadd.s32 %v129, 4294967240
  %v156 = vperm.slane %v75, %v155
  %vm157 = vcmask 523712
  %v158 = vsel %vm157, %v156, %v154
  %v159 = vperm.slane %v78, %v129
  %v160 = vperm.slane %v81, %v131
  %v161 = vsel %vm133, %v160, %v159
  %v162 = vperm.slane %v84, %v135
  %v163 = vsel %vm137, %v162, %v161
  %v164 = vperm.slane %v87, %v139
  %v165 = vsel %vm141, %v164, %v163
  %v166 = vperm.slane %v90, %v143
  %v167 = vsel %vm145, %v166, %v165
  %v168 = vperm.slane %v93, %v147
  %v169 = vsel %vm149, %v168, %v167
  %v170 = vperm.slane %v96, %v151
  %v171 = vsel %vm153, %v170, %v169
  %v172 = vperm.slane %v99, %v155
  %v173 = vsel %vm157, %v172, %v171
  %vm174 = vcmask 1041409
  %v175 = vsel %vm174, %v173, %v158
  %vm176 = vcmask 523264
  %v177 = vsel %vm176, %v175, 0
  %179 = vmatpush.msra.mxu0 0.0
  %180 = vmatpush.msra.mxu0 0.0
  %181 = vmatpush.msra.mxu0 0.0
  %182 = vmatpush.msra.mxu0 0.0
  %183 = vmatpush.msra.mxu0 0.0
  %184 = vmatpush.msra.mxu0 0.0
  %185 = vmatpush.msra.mxu0 0.0
  %186 = vmatpush.msra.mxu0 0.0
  %187 = vmatpush.msra.mxu0 %v107
  %188 = vmatpush.msra.mxu0 %v106
  %189 = vmatpush.msra.mxu0 %v105
  %190 = vmatpush.msra.mxu0 %v104
  %191 = vmatpush.msra.mxu0 %v103
  %192 = vmatpush.msra.mxu0 %v102
  %193 = vmatpush.msra.mxu0 %v101
  %194 = vmatpush.msra.mxu0 %v100
  %195 = vmatmul.f32.gmra.mxu0 %v177
  %v196 = vpop.f32.mrf.mxu0
  %v197 = vadd.f32 %v110, %v196
  %198 = vdwg.mxu0
  %v199 = vmax.f32 %v197, 0.0
  %v200 = vld [vmem:[%s3] sm:$0xf]
  %v201 = vld [vmem:[%s4] sm:$0x1]
  %v203 = vperm.slane %v201, 0
  %vm205 = vcmask 31744
  %v207 = vsel %vm205, %v199, 0
  %vm209 = vcmask 1043456
  %v211 = vsel %vm209, %v200, 0
  %213 = vmatpush.msra.mxu0 0.0
  %214 = vmatpush.msra.mxu0 0.0
  %215 = vmatpush.msra.mxu0 0.0
  %216 = vmatpush.msra.mxu0 0.0
  %217 = vmatpush.msra.mxu0 0.0
  %218 = vmatpush.msra.mxu0 0.0
  %219 = vmatpush.msra.mxu0 0.0
  %220 = vmatpush.msra.mxu0 0.0
  %221 = vmatpush.msra.mxu0 0.0
  %222 = vmatpush.msra.mxu0 0.0
  %223 = vmatpush.msra.mxu0 0.0
  %224 = vmatpush.msra.mxu0 0.0
  %225 = vmatpush.msra.mxu0 0.0
  %226 = vmatpush.msra.mxu0 0.0
  %227 = vmatpush.msra.mxu0 0.0
  %228 = vmatpush.msra.mxu0 %v211
  %229 = vmatmul.f32.gmra.mxu0 %v207
  %v230 = vpop.f32.mrf.mxu0
  %v231 = vadd.f32 %v203, %v230
  %232 = vdwg.mxu0
  %v233 = vxor.u32 %v231, 2147483648
  %v234 = vmul.f32 %v233, 1.442695
  %v235 = vpow.pop %v234
  %v236 = vadd.f32 %v235, 1.0
  %v237 = vrcp.pop %v236
  %v238 = vmul.f32 %v236, %v237
  %v239 = vsub.f32 1.0, %v238
  %v240 = vmul.f32 %v237, %v239
  %v241 = vadd.f32 %v237, %v240
  %vm242 = vweird.f32 %v236
  %vm243 = vweird.f32 %v237
  %vm244 = vmor %vm242, %vm243
  %v245 = vsel %vm244, %v237, %v241
  %v246 = vand.u32 2147483647, %v236
  %vm247 = vcmp.eq.f32.partialorder %v246, 8.507059e+37
  %v248 = vand.u32 %v236, 2147483648
  %v249 = vor.u32 1.1754944e-38, %v248
  %v250 = vsel %vm247, %v249, %v245
  %v251 = vmul.f32 1.0, %v250
  %v252 = vperm.slane %v251, 0
  %v253 = vlaneseq
  %v254 = vshrl.u32 %v253, 7
  %256 = vset.pattern.permute.xlu0 %v254
  %257 = vperm.xlu0 %256, %v252
  %v258 = vpop.permute.xlu0 %257
  %v259 = vlaneseq
  %v260 = vshrl.u32 %v259, 7
  %v261 = vadd.s32 %v260, 8
  %262 = vset.pattern.permute.xlu0 %v261
  %263 = vperm.xlu0 %262, %v252
  %v264 = vpop.permute.xlu0 %263
  %v265 = vlaneseq
  %v266 = vshrl.u32 %v265, 7
  %v267 = vadd.s32 %v266, 16
  %268 = vset.pattern.permute.xlu0 %v267
  %269 = vperm.xlu0 %268, %v252
  %v270 = vpop.permute.xlu0 %269
  %v271 = vlaneseq
  %v272 = vshrl.u32 %v271, 7
  %v273 = vadd.s32 %v272, 24
  %274 = vset.pattern.permute.xlu0 %v273
  %275 = vperm.xlu0 %274, %v252
  %v276 = vpop.permute.xlu0 %275
  %v277 = vlaneseq
  %v278 = vshrl.u32 %v277, 7
  %v279 = vadd.s32 %v278, 32
  %280 = vset.pattern.permute.xlu0 %v279
  %281 = vperm.xlu0 %280, %v252
  %v282 = vpop.permute.xlu0 %281
  %v283 = vlaneseq
  %v284 = vshrl.u32 %v283, 7
  %v285 = vadd.s32 %v284, 40
  %286 = vset.pattern.permute.xlu0 %v285
  %287 = vperm.xlu0 %286, %v252
  %v288 = vpop.permute.xlu0 %287
  %v289 = vlaneseq
  %v290 = vshrl.u32 %v289, 7
  %v291 = vadd.s32 %v290, 48
  %292 = vset.pattern.permute.xlu0 %v291
  %293 = vperm.xlu0 %292, %v252
  %v294 = vpop.permute.xlu0 %293
  %v295 = vlaneseq
  %v296 = vshrl.u32 %v295, 7
  %v297 = vadd.s32 %v296, 56
  %298 = vset.pattern.permute.xlu0 %v297
  %299 = vperm.xlu0 %298, %v252
  %v300 = vpop.permute.xlu0 %299
  %v301 = vperm.slane %v251, 1
  %v302 = vlaneseq
  %v303 = vshrl.u32 %v302, 7
  %305 = vset.pattern.permute.xlu0 %v303
  %306 = vperm.xlu0 %305, %v301
  %v307 = vpop.permute.xlu0 %306
  %v308 = vlaneseq
  %v309 = vshrl.u32 %v308, 7
  %v310 = vadd.s32 %v309, 8
  %311 = vset.pattern.permute.xlu0 %v310
  %312 = vperm.xlu0 %311, %v301
  %v313 = vpop.permute.xlu0 %312
  %v314 = vlaneseq
  %v315 = vshrl.u32 %v314, 7
  %v316 = vadd.s32 %v315, 16
  %317 = vset.pattern.permute.xlu0 %v316
  %318 = vperm.xlu0 %317, %v301
  %v319 = vpop.permute.xlu0 %318
  %v320 = vlaneseq
  %v321 = vshrl.u32 %v320, 7
  %v322 = vadd.s32 %v321, 24
  %323 = vset.pattern.permute.xlu0 %v322
  %324 = vperm.xlu0 %323, %v301
  %v325 = vpop.permute.xlu0 %324
  %v326 = vlaneseq
  %v327 = vshrl.u32 %v326, 7
  %v328 = vadd.s32 %v327, 32
  %329 = vset.pattern.permute.xlu0 %v328
  %330 = vperm.xlu0 %329, %v301
  %v331 = vpop.permute.xlu0 %330
  %v332 = vlaneseq
  %v333 = vshrl.u32 %v332, 7
  %v334 = vadd.s32 %v333, 40
  %335 = vset.pattern.permute.xlu0 %v334
  %336 = vperm.xlu0 %335, %v301
  %v337 = vpop.permute.xlu0 %336
  %v338 = vlaneseq
  %v339 = vshrl.u32 %v338, 7
  %v340 = vadd.s32 %v339, 48
  %341 = vset.pattern.permute.xlu0 %v340
  %342 = vperm.xlu0 %341, %v301
  %v343 = vpop.permute.xlu0 %342
  %v344 = vlaneseq
  %v345 = vshrl.u32 %v344, 7
  %v346 = vadd.s32 %v345, 56
  %347 = vset.pattern.permute.xlu0 %v346
  %348 = vperm.xlu0 %347, %v301
  %v349 = vpop.permute.xlu0 %348
  %v350 = vmul.f32 %v20, %v258
  %v351 = vmul.f32 %v21, %v258
  %v352 = vmul.f32 %v22, %v264
  %v353 = vmul.f32 %v23, %v264
  %v354 = vmul.f32 %v24, %v270
  %v355 = vmul.f32 %v25, %v270
  %v356 = vmul.f32 %v26, %v276
  %v357 = vmul.f32 %v27, %v276
  %v358 = vmul.f32 %v28, %v282
  %v359 = vmul.f32 %v29, %v282
  %v360 = vmul.f32 %v30, %v288
  %v361 = vmul.f32 %v31, %v288
  %v362 = vmul.f32 %v32, %v294
  %v363 = vmul.f32 %v33, %v294
  %v364 = vmul.f32 %v34, %v300
  %v365 = vmul.f32 %v35, %v300
  %v366 = vmul.f32 %v36, %v307
  %v367 = vmul.f32 %v37, %v307
  %v368 = vmul.f32 %v38, %v313
  %v369 = vmul.f32 %v39, %v313
  %v370 = vmul.f32 %v40, %v319
  %v371 = vmul.f32 %v41, %v319
  %v372 = vmul.f32 %v42, %v325
  %v373 = vmul.f32 %v43, %v325
  %v374 = vmul.f32 %v44, %v331
  %v375 = vmul.f32 %v45, %v331
  %v376 = vmul.f32 %v46, %v337
  %v377 = vmul.f32 %v47, %v337
  %v378 = vmul.f32 %v48, %v343
  %v379 = vmul.f32 %v49, %v343
  %v380 = vmul.f32 %v50, %v349
  %v381 = vmul.f32 %v51, %v349
  %382 = vst [vmem:[%s5] sm:$0xff] %v350
  %383 = vst [vmem:[%s5 + $0x8] sm:$0xff] %v351
  %384 = vst [vmem:[%s5 + $0x10] sm:$0xff] %v352
  %385 = vst [vmem:[%s5 + $0x18] sm:$0xff] %v353
  %386 = vst [vmem:[%s5 + $0x20] sm:$0xff] %v354
  %387 = vst [vmem:[%s5 + $0x28] sm:$0xff] %v355
  %388 = vst [vmem:[%s5 + $0x30] sm:$0xff] %v356
  %389 = vst [vmem:[%s5 + $0x38] sm:$0xff] %v357
  %390 = vst [vmem:[%s5 + $0x40] sm:$0xff] %v358
  %391 = vst [vmem:[%s5 + $0x48] sm:$0xff] %v359
  %392 = vst [vmem:[%s5 + $0x50] sm:$0xff] %v360
  %393 = vst [vmem:[%s5 + $0x58] sm:$0xff] %v361
  %394 = vst [vmem:[%s5 + $0x60] sm:$0xff] %v362
  %395 = vst [vmem:[%s5 + $0x68] sm:$0xff] %v363
  %396 = vst [vmem:[%s5 + $0x70] sm:$0xff] %v364
  %397 = vst [vmem:[%s5 + $0x78] sm:$0xff] %v365
  %398 = vst [vmem:[%s5 + $0x80] sm:$0xff] %v366
  %399 = vst [vmem:[%s5 + $0x88] sm:$0xff] %v367
  %400 = vst [vmem:[%s5 + $0x90] sm:$0xff] %v368
  %401 = vst [vmem:[%s5 + $0x98] sm:$0xff] %v369
  %402 = vst [vmem:[%s5 + $0xa0] sm:$0xff] %v370
  %403 = vst [vmem:[%s5 + $0xa8] sm:$0xff] %v371
  %404 = vst [vmem:[%s5 + $0xb0] sm:$0xff] %v372
  %405 = vst [vmem:[%s5 + $0xb8] sm:$0xff] %v373
  %406 = vst [vmem:[%s5 + $0xc0] sm:$0xff] %v374
  %407 = vst [vmem:[%s5 + $0xc8] sm:$0xff] %v375
  %408 = vst [vmem:[%s5 + $0xd0] sm:$0xff] %v376
  %409 = vst [vmem:[%s5 + $0xd8] sm:$0xff] %v377
  %410 = vst [vmem:[%s5 + $0xe0] sm:$0xff] %v378
  %411 = vst [vmem:[%s5 + $0xe8] sm:$0xff] %v379
  %412 = vst [vmem:[%s5 + $0xf0] sm:$0xff] %v380
  %413 = vst [vmem:[%s5 + $0xf8] sm:$0xff] %v381
  // Predicated region
  $region22: #{ca_layer.1} parent=0 // pred_check
    _
  $region23: #{ca_layer.1} parent=0 // pred_check_branch
    %415 = sbr.rel (0) target = $region25
  $region24: #{ca_layer.1} parent=0 // pred_region
    _
  $region25: #{ca_layer.1} parent=0 // pred_fallthru
    _
  // Predicated region
  $region26: #{ca_layer.1} parent=0 // pred_check
    _
  $region27: #{ca_layer.1} parent=0 // pred_check_branch
    %417 = sbr.rel (0) target = $region29
  $region28: #{ca_layer.1} parent=0 // pred_region
    _
  $region29: #{ca_layer.1} parent=0 // pred_fallthru
    _

</llo_original>
